<compile_context>
chip_gen: v7x
topology: tpu7x:2x2x1
jax: 0.10.0
libtpu: 0.0.40
codegen_flags: <defaults>
</compile_context>

<pallas_src>
import math

import numpy as np
import jax
import jax.numpy as jnp
from jax import lax
from jax.experimental import pallas as pl
from jax.experimental.pallas import tpu as pltpu


_PAD_DIST = 1e30  # squared-distance sentinel for padded memory-bank rows


def _round_up(x: int, m: int) -> int:
    return ((x + m - 1) // m) * m


# ----------------------------------------------------------------------------
# Generation-aware sizing helpers
# ----------------------------------------------------------------------------

_VMEM_BYTES_CACHE = None


def _tpu_vmem_bytes() -> int:
    """Per-core VMEM capacity (128 MiB on v5e/v6e, 64 MiB on v7x)."""
    global _VMEM_BYTES_CACHE
    if _VMEM_BYTES_CACHE is None:
        val = None
        try:
            info = pltpu.get_tpu_info()
            for attr in ("vmem_capacity_bytes", "vmem_bytes", "vmem_size_bytes"):
                v = getattr(info, attr, None)
                if isinstance(v, (int, np.integer)) and int(v) > 0:
                    val = int(v)
                    break
        except Exception:  # pragma: no cover - conservative fallback off-TPU
            val = None
        _VMEM_BYTES_CACHE = val if val is not None else (64 << 20)
    return _VMEM_BYTES_CACHE


def _default_nn_tiles():
    """(tn, tm, topk_tm_target) sized to the chip generation.

    128-MiB-VMEM chips (v5e/v6e): tn=1024 is past every crossover (v6e needs
    ~650 rows to go MXU-bound) and tm=2048 keeps bank-stream DMA per i-block
    low; v7x (64 MiB VMEM) uses tn=512/tm=1024 so double/triple-buffered tiles
    stay well under the smaller scoped-VMEM ceiling.
    """
    if _tpu_vmem_bytes() >= (96 << 20):
        return 1024, 2048, 4096
    return 512, 1024, 2048


def _vmem_limit(need_bytes: int) -> int:
    """Scoped-VMEM request: generous headroom, capped per generation.

    ~38 MiB ceiling on v7x (64 MiB physical), ~77 MiB on v5e/v6e (128 MiB).
    """
    cap = _tpu_vmem_bytes()
    ceiling = max(16 << 20, min(int(0.6 * cap), 80 << 20))
    return int(min(max(int(1.5 * need_bytes), 8 << 20), ceiling))


def _streaming_spec(block_shape, index_map, n_steps: int) -> pl.BlockSpec:
    """BlockSpec for the streamed memory-bank tile.

    When the stream is long enough for it to matter, ask for a 3-deep pipeline
    to hide DMA jitter on the only moving input (falls back to the default
    double buffer if this jax version lacks pipeline_mode).
    """
    if n_steps >= 3:
        try:
            return pl.BlockSpec(block_shape, index_map, pipeline_mode=pl.Buffered(3))
        except (TypeError, AttributeError):
            pass
    return pl.BlockSpec(block_shape, index_map)


def _expand_tile(tm: int, num_tiles: int, target: int) -> int:
    """Grow a bank tile by powers of two while it still divides the padded bank."""
    target = max(target, tm)
    t, n = tm, num_tiles
    while n % 2 == 0 and t * 2 <= target:
        t *= 2
        n //= 2
    return t


# ----------------------------------------------------------------------------
# Pallas kernels
# ----------------------------------------------------------------------------

def _make_pool_kernel(H: int, W: int, count_include_pad: bool):
    """3x3/stride-1/pad-1 avg pool on a lane-dense (H, lane_tile) block.

    H-pass = tiny banded matmul (implicit zero padding along H); W-pass =
    +/-1 lane rolls masked so the shift never crosses an image boundary.
    Masks and the averaging factor are built in-kernel from iota (no DMAed
    mask / recip slabs).  The banded H-pass stays on the MXU on purpose: it is
    3-tap, H is small, nothing else in this kernel uses the MXU, and the
    kernel is HBM-bound either way.
    """
    def kernel(band_ref, x_ref, o_ref):
        x = x_ref[...]
        lanes = x.shape[1]
        t = jnp.dot(band_ref[...], x, preferred_element_type=jnp.float32)
        wi = lax.broadcasted_iota(jnp.int32, x.shape, 1) % W
        left = pltpu.roll(t, shift=1, axis=1)              # west neighbor
        right = pltpu.roll(t, shift=lanes - 1, axis=1)      # east neighbor
        s = t + jnp.where(wi > 0, left, 0.0) + jnp.where(wi < W - 1, right, 0.0)
        if count_include_pad:
            o_ref[...] = s * (1.0 / 9.0)
        else:
            hi = lax.broadcasted_iota(jnp.int32, x.shape, 0)
            ch = 3.0 - (hi == 0) - (hi == H - 1)
            cw = 3.0 - (wi == 0) - (wi == W - 1)
            o_ref[...] = s / (ch * cw)
    return kernel


def _blur_fused_kernel(x_ref, bh_ref, bwt_ref, o_ref):
    """One anomaly map per grid step: out = bh @ img @ bw.T (both passes fused)."""
    img = x_ref[0]                                           # (H, W)
    t = jnp.dot(bh_ref[...], img, preferred_element_type=jnp.float32)
    o_ref[0] = jnp.dot(t, bwt_ref[...], preferred_element_type=jnp.float32)


def _nn_min_kernel(e_ref, m_ref, msq_ref, e2_ref, score_ref, loc_ref):
    """Fused torch.cdist(p=2).min(1) against the memory bank.

    The bank matrix is pre-scaled by -2, so per tile only ||m||^2 - 2<e,m> is
    tracked (e2 is constant across j, it cannot change the argmin); e2 and the
    sqrt are applied once in the finalize branch.  Outputs are resident across
    j (accumulator pattern), so no scratch buffers are needed.
    """
    j = pl.program_id(1)
    tm = m_ref.shape[0]

    @pl.when(j == 0)
    def _():
        score_ref[...] = jnp.full(score_ref.shape, jnp.inf, dtype=score_ref.dtype)
        loc_ref[...] = jnp.zeros(loc_ref.shape, dtype=loc_ref.dtype)

    g = lax.dot_general(e_ref[...], m_ref[...], (((1,), (1,)), ((), ())),
                        preferred_element_type=jnp.float32)          # -2<e,m>  (tn, tm)
    d2m = msq_ref[...] + g                                            # ||m||^2 - 2<e,m>

    idx = lax.broadcasted_iota(jnp.int32, d2m.shape, 1)
    tile_min = jnp.min(d2m, axis=1, keepdims=True)                    # (tn, 1)
    tile_arg = jnp.min(jnp.where(d2m == tile_min, idx, jnp.int32(2 ** 30)),
                       axis=1, keepdims=True) + j * tm                # (tn, 1)

    better = tile_min < score_ref[...]
    loc_ref[...] = jnp.where(better, tile_arg, loc_ref[...])
    score_ref[...] = jnp.where(better, tile_min, score_ref[...])

    @pl.when(j == pl.num_programs(1) - 1)
    def _():
        score_ref[...] = jnp.sqrt(jnp.maximum(score_ref[...] + e2_ref[...], 0.0))


def _cdist_sq_kernel(q_ref, m_ref, msq_ref, q2_ref, d_ref):
    """Squared euclidean distances (sqrt applied by the caller on kept values only)."""
    g = lax.dot_general(q_ref[...], m_ref[...], (((1,), (1,)), ((), ())),
                        preferred_element_type=jnp.float32)           # -2<q,m>
    d_ref[...] = jnp.maximum(q2_ref[...] + msq_ref[...] + g, 0.0)


# ----------------------------------------------------------------------------
# Pallas wrappers
# ----------------------------------------------------------------------------

_BAND_CACHE = {}
_BLUR_MAT_CACHE = {}


def _band_matrix(size: int) -> jnp.ndarray:
    if size not in _BAND_CACHE:
        idx = np.arange(size)
        _BAND_CACHE[size] = jnp.asarray(
            (np.abs(idx[:, None] - idx[None, :]) <= 1).astype(np.float32))
    return _BAND_CACHE[size]


def _pool_lane_tile(L: int, W: int, max_lanes: int = 8192) -> int:
    """Largest lane tile that is 128-aligned AND a multiple of the image width W
    (so the +/-1 lane rolls never cross an image boundary within a tile)."""
    unit = (W * 128) // math.gcd(W, 128)     # lcm(W, 128)
    if L % unit != 0 or L < 2 * unit:
        return L                             # single grid step for tiny maps
    tile = unit
    while tile * 2 <= max_lanes and L % (tile * 2) == 0 and L // (tile * 2) >= 2:
        tile *= 2
    return tile


def avg_pool_3x3_s1_p1(x: jnp.ndarray, count_include_pad: bool = True) -> jnp.ndarray:
    """torch.nn.AvgPool2d(3, 1, 1, count_include_pad=...) on NCHW input."""
    B, C, H, W = x.shape
    L = B * C * W
    xt = jnp.transpose(x, (2, 0, 1, 3)).reshape(H, L).astype(jnp.float32)

    band = _band_matrix(H)                   # (H, H), cached
    lane_tile = _pool_lane_tile(L, W)
    kernel = _make_pool_kernel(H, W, count_include_pad)

    out = pl.pallas_call(
        kernel,
        out_shape=jax.ShapeDtypeStruct((H, L), jnp.float32),
        grid=(L // lane_tile,),
        in_specs=[pl.BlockSpec((H, H), lambda i: (0, 0)),
                  pl.BlockSpec((H, lane_tile), lambda i: (0, i))],
        out_specs=pl.BlockSpec((H, lane_tile), lambda i: (0, i)),
        compiler_params=pltpu.CompilerParams(dimension_semantics=("parallel",)),
    )(band, xt)
    return jnp.transpose(out.reshape(H, B, C, W), (1, 2, 0, 3))


def _blur_matrix(size: int, kernel_size: int, sigma: float) -> jnp.ndarray:
    key = (size, kernel_size, float(sigma))
    if key in _BLUR_MAT_CACHE:
        return _BLUR_MAT_CACHE[key]
    half = kernel_size // 2
    taps = np.arange(kernel_size) - half
    g = np.exp(-(taps.astype(np.float64) ** 2) / (2.0 * sigma * sigma))
    g = g / g.sum()
    # TODO(synk): anomalib uses kornia GaussianBlur2d (reflect border);
    # replicate-clamp border is used here.
    idx = np.clip(np.arange(size)[:, None] + taps[None, :], 0, size - 1)
    mat = np.zeros((size, size), np.float32)
    np.add.at(mat, (np.repeat(np.arange(size), kernel_size), idx.ravel()),
              np.tile(g, size))
    out = jnp.asarray(mat)
    _BLUR_MAT_CACHE[key] = out
    return out


def gaussian_blur_pallas(x: jnp.ndarray, sigma: float = 4.0) -> jnp.ndarray:
    """Separable Gaussian blur, both passes fused in one pallas_call over B*C maps."""
    B, C, H, W = x.shape
    ks = 2 * int(4.0 * sigma + 0.5) + 1
    bh = _blur_matrix(H, ks, sigma)                     # (H, H)
    bw_t = jnp.transpose(_blur_matrix(W, ks, sigma))    # (W, W) = bw.T
    xf = x.reshape(B * C, H, W).astype(jnp.float32)

    out = pl.pallas_call(
        _blur_fused_kernel,
        out_shape=jax.ShapeDtypeStruct((B * C, H, W), jnp.float32),
        grid=(B * C,),
        in_specs=[pl.BlockSpec((1, H, W), lambda i: (i, 0, 0)),
                  pl.BlockSpec((H, H), lambda i: (0, 0)),
                  pl.BlockSpec((W, W), lambda i: (0, 0))],
        out_specs=pl.BlockSpec((1, H, W), lambda i: (i, 0, 0)),
        compiler_params=pltpu.CompilerParams(dimension_semantics=("parallel",)),
    )(xf, bh, bw_t)
    return out.reshape(B, C, H, W)


def prepare_memory_bank(memory_bank: jnp.ndarray, tm: int = None,
                        matmul_dtype=jnp.bfloat16):
    """Pad/cast the memory bank once.

    The cdist "-2" factor is folded into the bank here (exact power-of-two
    scale, applied before the low-precision cast) so the streaming kernels
    compute `msq + <e, m_scaled>` with no per-tile multiply.
    """
    if tm is None:
        tm = _default_nn_tiles()[1]
    mb = memory_bank.astype(jnp.float32)
    M, E = mb.shape
    Ep = _round_up(E, 128)
    tm = min(tm, _round_up(M, 128))
    Mp = _round_up(M, tm)
    msq = jnp.sum(mb * mb, axis=1)
    msq = jnp.pad(msq, (0, Mp - M), constant_values=_PAD_DIST)[None, :]   # (1, Mp) f32
    mat = jnp.pad(-2.0 * mb, ((0, Mp - M), (0, Ep - E))).astype(matmul_dtype)  # (Mp, Ep)
    return mat, msq, tm, M


def nearest_neighbor_min(embedding: jnp.ndarray, mb_mat: jnp.ndarray,
                         mb_sq: jnp.ndarray, tm: int, *, tn: int = None,
                         matmul_dtype=jnp.bfloat16):
    """patch_scores, locations = torch.cdist(embedding, memory_bank, p=2).min(1)."""
    if tn is None:
        tn = _default_nn_tiles()[0]
    N, E = embedding.shape
    Mp, Ep = mb_mat.shape

    emb32 = embedding.astype(jnp.float32)
    e2 = jnp.sum(emb32 * emb32, axis=1, keepdims=True)                # (N, 1) f32

    # Keep the tile big (arithmetic intensity ~= tn FLOPs per bank byte) but
    # rebalance so padded rows stay minimal and the "parallel" i-axis keeps at
    # least 2 blocks (both v7x TensorCores) whenever N allows it.
    tn = min(tn, _round_up(N, 8))
    n_i = -(-N // tn)
    tn = _round_up(-(-N // n_i), 8)
    Np = _round_up(N, tn)
    e_mat = jnp.pad(emb32, ((0, Np - N), (0, Ep - E))).astype(matmul_dtype)
    e2 = jnp.pad(e2, ((0, Np - N), (0, 0)))

    n_j = Mp // tm
    itemsize = jnp.dtype(matmul_dtype).itemsize
    nbuf = 3 if n_j >= 3 else 2
    need = (2 * tn * Ep * itemsize + nbuf * tm * (Ep * itemsize + 4)
            + tn * tm * 4 + 2 * tn * 8 + (1 << 20))

    scores, locs = pl.pallas_call(
        _nn_min_kernel,
        out_shape=(jax.ShapeDtypeStruct((Np, 1), jnp.float32),
                   jax.ShapeDtypeStruct((Np, 1), jnp.int32)),
        grid=(Np // tn, n_j),
        in_specs=[
            pl.BlockSpec((tn, Ep), lambda i, j: (i, 0)),
            _streaming_spec((tm, Ep), lambda i, j: (j, 0), n_j),
            pl.BlockSpec((1, tm), lambda i, j: (0, j)),
            pl.BlockSpec((tn, 1), lambda i, j: (i, 0)),
        ],
        out_specs=(pl.BlockSpec((tn, 1), lambda i, j: (i, 0)),
                   pl.BlockSpec((tn, 1), lambda i, j: (i, 0))),
        compiler_params=pltpu.CompilerParams(
            dimension_semantics=("parallel", "arbitrary"),
            vmem_limit_bytes=_vmem_limit(need)),
    )(e_mat, mb_mat, mb_sq, e2)
    return scores[:N, 0], locs[:N, 0]


def cdist_squared_pallas(queries: jnp.ndarray, mb_mat: jnp.ndarray,
                         mb_sq: jnp.ndarray, tm: int, *, tm_target: int = None,
                         matmul_dtype=jnp.bfloat16) -> jnp.ndarray:
    """Squared torch.cdist(queries, memory_bank, p=2)**2 over the padded bank."""
    Nq, E = queries.shape
    Mp, Ep = mb_mat.shape
    if tm_target is not None:
        # query side is tiny (batch_size rows) -> grow the bank tile to amortize
        # the per-grid-step overhead of this pure bank-streaming kernel.
        tm = _expand_tile(tm, Mp // tm, tm_target)

    q32 = queries.astype(jnp.float32)
    q2 = jnp.sum(q32 * q32, axis=1, keepdims=True)                    # (Nq, 1) f32
    Nqp = _round_up(Nq, 8)
    q_mat = jnp.pad(q32, ((0, Nqp - Nq), (0, Ep - E))).astype(matmul_dtype)
    q2 = jnp.pad(q2, ((0, Nqp - Nq), (0, 0)))

    n_j = Mp // tm
    itemsize = jnp.dtype(matmul_dtype).itemsize
    nbuf = 3 if n_j >= 3 else 2
    need = (2 * Nqp * Ep * itemsize + nbuf * tm * (Ep * itemsize + 4)
            + 2 * Nqp * tm * 4 + 2 * Nqp * 4 + (1 << 20))

    d2 = pl.pallas_call(
        _cdist_sq_kernel,
        out_shape=jax.ShapeDtypeStruct((Nqp, Mp), jnp.float32),
        grid=(n_j,),
        in_specs=[
            pl.BlockSpec((Nqp, Ep), lambda j: (0, 0)),
            _streaming_spec((tm, Ep), lambda j: (j, 0), n_j),
            pl.BlockSpec((1, tm), lambda j: (0, j)),
            pl.BlockSpec((Nqp, 1), lambda j: (0, 0)),
        ],
        out_specs=pl.BlockSpec((Nqp, tm), lambda j: (0, j)),
        compiler_params=pltpu.CompilerParams(
            dimension_semantics=("arbitrary",),
            vmem_limit_bytes=_vmem_limit(need)),
    )(q_mat, mb_mat, mb_sq, q2)
    return d2[:Nq]


# ----------------------------------------------------------------------------
# Glue helpers (reshape / resize)
# ----------------------------------------------------------------------------

def _nearest_indices(out_size: int, in_size: int, exact: bool) -> jnp.ndarray:
    d = np.arange(out_size)
    if exact:   # F.interpolate(..., mode='nearest-exact')
        idx = ((2 * d + 1) * in_size) // (2 * out_size)
    else:       # F.interpolate default mode='nearest'
        idx = (d * in_size) // out_size
    return jnp.asarray(np.clip(idx, 0, in_size - 1).astype(np.int32))


def nearest_resize(x: jnp.ndarray, size, exact: bool = False) -> jnp.ndarray:
    hi = _nearest_indices(size[0], x.shape[-2], exact)
    wi = _nearest_indices(size[1], x.shape[-1], exact)
    x = jnp.take(x, hi, axis=-2)
    return jnp.take(x, wi, axis=-1)


# ----------------------------------------------------------------------------
# PatchcoreModel (Pallas)
# ----------------------------------------------------------------------------

class PatchcoreModelPallas:
    """JAX/Pallas port of anomalib PatchcoreModel (default CNN-backbone branch)."""

    def __init__(self, input_size=(16, 16), layers=("layer2", "layer3"),
                 backbone="wide_resnet50_2", feature_pooler=None,
                 num_neighbors: int = 9, in_channels: int = 4, seed: int = 0,
                 matmul_dtype=jnp.bfloat16, nn_tile_n: int = None,
                 nn_tile_m: int = None, topk_tile_m: int = None):
        self.input_size = tuple(input_size)
        self.layers = list(layers)
        self.backbone = backbone
        self.num_neighbors = num_neighbors
        # bf16 is used for the MXU matmuls only; squared norms stay in f32.
        # Pass matmul_dtype=jnp.float32 for accuracy-sensitive deployments
        # where bf16 rounding could flip near-tie argmins vs torch's f32 cdist.
        self.matmul_dtype = matmul_dtype
        tn_def, tm_def, tmk_def = _default_nn_tiles()
        self.nn_tile_n = nn_tile_n if nn_tile_n is not None else tn_def
        self.nn_tile_m = nn_tile_m if nn_tile_m is not None else tm_def
        self.topk_tile_m = topk_tile_m if topk_tile_m is not None else tmk_def

        if feature_pooler is None:
            feature_pooler = {"name": "avg", "count_include_pad": True}
        if feature_pooler["name"] != "avg":
            # TODO(synk): MaxPool2d(3,1,1) feature pooler variant not implemented.
            raise NotImplementedError("only the default avg feature pooler is implemented")
        self.count_include_pad = feature_pooler.get("count_include_pad", True)

        # Deterministic synthetic backbone weights (stand-in for wide_resnet50_2).
        key = jax.random.PRNGKey(seed)
        k1, k2 = jax.random.split(key)
        self.w_layer2 = 0.1 * jax.random.normal(k1, (24, in_channels, 3, 3), jnp.float32)
        self.w_layer3 = 0.1 * jax.random.normal(k2, (32, 24, 3, 3), jnp.float32)

        # Registered buffers.
        self.embedding_width = jnp.zeros((0,), jnp.int32)
        self.embedding_height = jnp.zeros((0,), jnp.int32)
        self.memory_bank_positions = jnp.zeros((0,), jnp.int32)
        self.memory_bank = jnp.zeros((0, 0), jnp.float32)
        self.embedding = jnp.zeros((0, 0), jnp.float32)
        self.emb_range_for_train_paths = {}

        # Cached padded / cast memory bank for the NN kernels.
        self._mb_mat = None
        self._mb_sq = None
        self._mb_tm = None
        self._mb_valid = 0
        # TODO(synk): tiler, ViT/DINOv2/simple-backbone branches and the
        # mask_neighbors / nearest_neighbors_masked path-bookkeeping are not ported.

    # -------------------- backbone (glue, synthetic) ------------------------
    def _feature_extractor(self, x):
        dn = ("NCHW", "OIHW", "NCHW")
        f2 = lax.conv_general_dilated(x, self.w_layer2, (2, 2), "SAME",
                                      dimension_numbers=dn)
        f2 = jnp.tanh(f2)
        f3 = lax.conv_general_dilated(f2, self.w_layer3, (2, 2), "SAME",
                                      dimension_numbers=dn)
        f3 = jnp.tanh(f3)
        return {"layer2": f2, "layer3": f3}

    # -------------------- PatchCore pieces -----------------------------------
    def generate_embedding(self, features):
        embeddings = features[self.layers[0]]
        for layer in self.layers[1:]:
            layer_embedding = features[layer]
            layer_embedding = nearest_resize(layer_embedding,
                                             embeddings.shape[-2:], exact=True)
            embeddings = jnp.concatenate((embeddings, layer_embedding), axis=1)
        return embeddings

    @staticmethod
    def reshape_embedding(embedding):
        embedding_size = embedding.shape[1]
        return jnp.transpose(embedding, (0, 2, 3, 1)).reshape(-1, embedding_size)

    def subsample_embedding(self, embedding, sampling_ratio: float):
        if sampling_ratio < 1.0:
            # TODO(synk): KCenterGreedy coreset sampling not implemented.
            raise NotImplementedError("coreset subsampling (ratio < 1.0) not implemented")
        self.memory_bank = embedding
        self.memory_bank_positions = jnp.arange(embedding.shape[0], dtype=jnp.int32)
        self.embedding = embedding
        self._mb_mat, self._mb_sq, self._mb_tm, self._mb_valid = prepare_memory_bank(
            embedding, tm=self.nn_tile_m, matmul_dtype=self.matmul_dtype)

    def nearest_neighbors(self, embedding, n_neighbors: int):
        if n_neighbors == 1:
            return nearest_neighbor_min(embedding, self._mb_mat, self._mb_sq,
                                        self._mb_tm, tn=self.nn_tile_n,
                                        matmul_dtype=self.matmul_dtype)
        # TODO(synk): fuse a running per-row top-k into the bank-streaming kernel
        # for very large banks; queries here are only batch_size rows, so the
        # dense (Nq, Mp) squared-distance matrix is tiny in practice.
        d2 = cdist_squared_pallas(embedding, self._mb_mat, self._mb_sq, self._mb_tm,
                                  tm_target=self.topk_tile_m,
                                  matmul_dtype=self.matmul_dtype)[:, :self._mb_valid]
        neg_d2, locations = lax.top_k(-d2, n_neighbors)              # ascending distances
        patch_scores = jnp.sqrt(jnp.maximum(-neg_d2, 0.0))           # sqrt only on kept values
        return patch_scores, locations

    def compute_anomaly_score(self, patch_scores, locations, embedding):
        if self.num_neighbors == 1:
            return jnp.max(patch_scores, axis=1)
        batch_size, num_patches = patch_scores.shape
        b_idx = jnp.arange(batch_size)
        max_patches = jnp.argmax(patch_scores, axis=1)
        emb3 = embedding.reshape(batch_size, num_patches, -1)
        max_patches_features = emb3[b_idx, max_patches]
        score = patch_scores[b_idx, max_patches]
        nn_index = locations[b_idx, max_patches]
        nn_sample = self.memory_bank[nn_index, :]
        _, support_samples = self.nearest_neighbors(nn_sample, self.num_neighbors)
        support_feats = self.memory_bank[support_samples]             # (B, k, E)
        diffs = max_patches_features[:, None, :] - support_feats
        distances = jnp.sqrt(jnp.maximum(jnp.sum(diffs * diffs, axis=-1), 0.0))  # (B, k)
        # anomalib: weights = (1 - softmax(distances))[:, 0] with distances[:, 0]
        # being the distance to nn_sample itself.  Compute that numerator
        # explicitly so the result does not depend on support-sample ordering
        # (which bf16 noise / ties could perturb).
        d_nn = jnp.sqrt(jnp.maximum(
            jnp.sum((max_patches_features - nn_sample) ** 2, axis=-1), 0.0))     # (B,)
        m = jnp.maximum(jnp.max(distances, axis=1), d_nn)
        weights = 1.0 - jnp.exp(d_nn - m) / jnp.sum(jnp.exp(distances - m[:, None]), axis=1)
        return weights * score

    def anomaly_map_generator(self, patch_scores):
        up = nearest_resize(patch_scores, self.input_size, exact=False)
        return gaussian_blur_pallas(up, sigma=4.0)

    # -------------------- forward --------------------------------------------
    def forward(self, input_tensor, training: bool = False):
        features = self._feature_extractor(input_tensor)
        features = {layer: avg_pool_3x3_s1_p1(feat, self.count_include_pad)
                    for layer, feat in features.items()}
        embedding_map = self.generate_embedding(features)
        batch_size, _, width, height = embedding_map.shape
        embedding = self.reshape_embedding(embedding_map)

        self.embedding_width = jnp.array([width], jnp.int32)
        self.embedding_height = jnp.array([height], jnp.int32)

        if training:
            return embedding

        patch_scores, locations = self.nearest_neighbors(embedding, n_neighbors=1)
        patch_scores = patch_scores.reshape((batch_size, -1))
        locations = locations.reshape((batch_size, -1))
        anomaly_score = self.compute_anomaly_score(patch_scores, locations, embedding)
        patch_scores = patch_scores.reshape((batch_size, 1, width, height))
        anomaly_map = self.anomaly_map_generator(patch_scores)
        return anomaly_map, anomaly_score


# ----------------------------------------------------------------------------
# Demo
# ----------------------------------------------------------------------------

if __name__ == "__main__":
    key = jax.random.PRNGKey(0)
    k_train, k_test = jax.random.split(key)

    B, C, H, W = 2, 4, 16, 16
    x_train = jax.random.normal(k_train, (B, C, H, W), jnp.float32)
    x_test = jax.random.normal(k_test, (B, C, H, W), jnp.float32)

    model = PatchcoreModelPallas(input_size=(H, W), layers=["layer2", "layer3"],
                                 num_neighbors=9, in_channels=C, seed=0)

    # "Training" pass: build embeddings and fill the memory bank (ratio 1.0).
    train_embedding = model.forward(x_train, training=True)          # (B*8*8, 56)
    model.subsample_embedding(train_embedding, sampling_ratio=1.0)

    # "Testing" pass: anomaly map + image-level anomaly score.
    anomaly_map, anomaly_score = model.forward(x_test, training=False)

    jax.block_until_ready((train_embedding, anomaly_map, anomaly_score))

    assert train_embedding.shape == (B * 8 * 8, 24 + 32)
    assert anomaly_map.shape == (B, 1, H, W)
    assert anomaly_score.shape == (B,)
    assert bool(jnp.all(jnp.isfinite(anomaly_map)))
    assert bool(jnp.all(jnp.isfinite(anomaly_score)))
    print("KERNEL_OK")
</pallas_src>

<mosaic_0001>
module attributes {stable_mosaic.version = 11 : i64} {
  func.func @kernel(%arg0: i32, %arg1: memref<8x8xf32, #tpu.memory_space<vmem>>, %arg2: memref<8x128xf32, #tpu.memory_space<vmem>>, %arg3: memref<8x128xf32, #tpu.memory_space<vmem>>) attributes {dimension_semantics = [#tpu.dimension_semantics<parallel>], iteration_bounds = array<i64: 3>, scalar_prefetch = 0 : i64, scratch_operands = 0 : i64, tpu.core_type = #tpu.core_type<tc>, window_params = [{pipeline_mode = #tpu.pipeline_mode<synchronous>, transform_indices = @transform_0, window_bounds = array<i64: 8, 8>}, {transform_indices = @transform_1, window_bounds = array<i64: 8, 128>}, {transform_indices = @transform_2, window_bounds = array<i64: 8, 128>}]} {
    %c0 = arith.constant 0 : index
    %c0_0 = arith.constant 0 : index
    %0 = vector.load %arg2[%c0, %c0_0] : memref<8x128xf32, #tpu.memory_space<vmem>>, vector<8x128xf32>
    %c0_1 = arith.constant 0 : index
    %c0_2 = arith.constant 0 : index
    %1 = vector.load %arg1[%c0_1, %c0_2] : memref<8x8xf32, #tpu.memory_space<vmem>>, vector<8x8xf32>
    %cst = arith.constant dense<0.000000e+00> : vector<8x128xf32>
    %2 = tpu.matmul %1, %0, %cst {dimension_numbers = #tpu.dot_dimension_numbers<[1], [0], [0], [1], [0, 0, 1, 1], [], []>} : vector<8x8xf32>, vector<8x128xf32>, vector<8x128xf32> -> vector<8x128xf32>
    %3 = tpu.iota {dimensions = array<i32: 1>} : vector<8x128xi32>
    %c8_i32 = arith.constant 8 : i32
    %c0_i32 = arith.constant 0 : i32
    %4 = arith.cmpi eq, %c8_i32, %c0_i32 : i32
    %c1_i32 = arith.constant 1 : i32
    %5 = arith.select %4, %c1_i32, %c8_i32 : i32
    %6 = vector.broadcast %5 : i32 to vector<8x128xi32>
    %7 = arith.remsi %3, %6 : vector<8x128xi32>
    %c0_i32_3 = arith.constant 0 : i32
    %8 = vector.broadcast %c0_i32_3 : i32 to vector<8x128xi32>
    %9 = arith.cmpi ne, %7, %8 : vector<8x128xi32>
    %c0_i32_4 = arith.constant 0 : i32
    %10 = vector.broadcast %c0_i32_4 : i32 to vector<8x128xi32>
    %11 = arith.cmpi slt, %7, %10 : vector<8x128xi32>
    %c0_i32_5 = arith.constant 0 : i32
    %12 = arith.cmpi slt, %5, %c0_i32_5 : i32
    %13 = vector.broadcast %12 : i1 to vector<8x128xi1>
    %14 = vector.broadcast %13 : vector<8x128xi1> to vector<8x128xi1>
    %15 = arith.xori %11, %14 : vector<8x128xi1>
    %16 = arith.andi %15, %9 : vector<8x128xi1>
    %17 = vector.broadcast %5 : i32 to vector<8x128xi32>
    %18 = arith.addi %7, %17 : vector<8x128xi32>
    %19 = arith.select %16, %18, %7 : vector<8x128xi1>, vector<8x128xi32>
    %c1_i32_6 = arith.constant 1 : i32
    %20 = tpu.dynamic_rotate %2 by %c1_i32_6 dim 1 : vector<8x128xf32>, i32 -> vector<8x128xf32>
    %c127_i32 = arith.constant 127 : i32
    %21 = tpu.dynamic_rotate %2 by %c127_i32 dim 1 : vector<8x128xf32>, i32 -> vector<8x128xf32>
    %c0_i32_7 = arith.constant 0 : i32
    %22 = vector.broadcast %c0_i32_7 : i32 to vector<8x128xi32>
    %23 = arith.cmpi sgt, %19, %22 : vector<8x128xi32>
    %cst_8 = arith.constant 0.000000e+00 : f32
    %24 = vector.broadcast %cst_8 : f32 to vector<8x128xf32>
    %25 = arith.select %23, %20, %24 : vector<8x128xi1>, vector<8x128xf32>
    %26 = arith.addf %2, %25 : vector<8x128xf32>
    %c7_i32 = arith.constant 7 : i32
    %27 = vector.broadcast %c7_i32 : i32 to vector<8x128xi32>
    %28 = arith.cmpi slt, %19, %27 : vector<8x128xi32>
    %cst_9 = arith.constant 0.000000e+00 : f32
    %29 = vector.broadcast %cst_9 : f32 to vector<8x128xf32>
    %30 = arith.select %28, %21, %29 : vector<8x128xi1>, vector<8x128xf32>
    %31 = arith.addf %26, %30 : vector<8x128xf32>
    %cst_10 = arith.constant 0.111111112 : f32
    %32 = vector.broadcast %cst_10 : f32 to vector<8x128xf32>
    %33 = arith.mulf %31, %32 : vector<8x128xf32>
    %c0_11 = arith.constant 0 : index
    %c0_12 = arith.constant 0 : index
    %34 = vector.load %arg3[%c0_11, %c0_12] : memref<8x128xf32, #tpu.memory_space<vmem>>, vector<8x128xf32>
    tpu.vector_store %arg3[%c0_11, %c0_12], %33 {strides = array<i32>} : memref<8x128xf32, #tpu.memory_space<vmem>>, vector<8x128xf32>,
    return
  }
  func.func @transform_0(%arg0: i32) -> (i32, i32) {
    %c0_i32 = arith.constant 0 : i32
    %c0_i32_0 = arith.constant 0 : i32
    %c0_i32_1 = arith.constant 0 : i32
    return %c0_i32, %c0_i32_0 : i32, i32
  }
  func.func @transform_1(%arg0: i32) -> (i32, i32) {
    %c0_i32 = arith.constant 0 : i32
    %c0_i32_0 = arith.constant 0 : i32
    return %c0_i32, %arg0 : i32, i32
  }
  func.func @transform_2(%arg0: i32) -> (i32, i32) {
    %c0_i32 = arith.constant 0 : i32
    %c0_i32_0 = arith.constant 0 : i32
    return %c0_i32, %arg0 : i32, i32
  }
}

</mosaic_0001>

<llo_original>
// kernel: tpu_custom_call.1
$region0: #{tpu_custom_call.1}
  #allocation0 [shape = 'u32[]', space=smem, size = 0x4, offset = 0x4, fixed_abs, tag = 'smem constant byte address 0x4 - core index']
  #allocation1 [shape = 'u32[144,128]{1,0:T(1,128)}', space=vmem, size = 0x12000, scoped, tag = 'internal scratch']
  %s0 = inlined_call_operand.hbm [shape: f32[8,8], index: 0, kind: input, shape index: {}]
  %s1 = inlined_call_operand.hbm [shape: f32[8,384], index: 1, kind: input, shape index: {}]
  %s2 = inlined_call_operand.hbm [shape: f32[8,384], index: 2, kind: output, shape index: {}]
  %s3 = sld [smem:[#allocation0]]
  $region49: #{tpu_custom_call.1} parent=0
    _
  %s5 = ssub.s32 1, %s3
  %s6 = scalar_select 0, %s5, %s3
  $region1: #{tpu_custom_call.1} parent=0
    #allocation2 [shape = 'u8[4096]{0}', space=vmem, size = 0x1000, scoped, tag = 'input window, operand 0, single buffered']
    #allocation3 [shape = 's32[2]{0}', space=sflag, size = 0x8, scoped, tag = 'scoped memory for tpu_custom_call.1']
    #allocation4 [shape = 's32[2]{0}', space=sflag, size = 0x8, scoped, tag = 'scoped memory for tpu_custom_call.1']
    #allocation5 [shape = 'u8[8192]{0}', space=vmem, size = 0x2000, scoped, tag = 'input window, operand 1']
    #allocation6 [shape = 's32[2]{0}', space=sflag, size = 0x8, scoped, tag = 'scoped memory for tpu_custom_call.1']
    #allocation7 [shape = 'u8[8192]{0}', space=vmem, size = 0x2000, scoped, tag = 'output window, operand 0']
    %7 = vsyncpa [#allocation3], 0
    %8 = vsyncpa [#allocation6], 0
    %s9 = scalar_lea.sflag [#allocation6], 1
    %10 = vsyncpa %s9, 0
    %11 = vsyncpa [#allocation4], 0
    %s12 = scalar_lea.sflag [#allocation4], 1
    %13 = vsyncpa %s12, 0
    loop: start=0, step=1, limit=5
    $region2: #{tpu_custom_call.1} parent=1 // loop_pre_header
      _
    $region3: #{tpu_custom_call.1} parent=1 // loop_header
      %s15 = sphi 0, %s19
      %p16 = scmp.ge.s32.totalorder %s15, 5
      %s23 = sphi 0, %s23
      %s25 = sphi 0, %s23
      %s26 = sphi 0, %s25
      %s40 = sphi 0, %s26
      %s46 = sphi 0, %s48
      %s49 = sphi 0, %s46
      %s50 = sphi 0, %s49
      %s66 = sphi 0, %s50
      %s72 = sphi 0, %s74
      %s75 = sphi 0, %s72
      %s76 = sphi 0, %s75
      %s92 = sphi 0, %s76
    $region4: #{tpu_custom_call.1} parent=1 // loop_header_branch
      %18 = sbr.rel (%p16) target = $region8
    $region5: #{tpu_custom_call.1} parent=1 // loop_body
      %s20 = ssub.s32 %s15, 1
      %s21 = ssub.s32 %s15, 2
      %s22 = sadd.s32 %s15, 1
      %s24 = sadd.s32 %s23, 1
      %p27 = scmp.eq.s32.totalorder %s15, 2
      %p28 = scmp.ne.s32.totalorder %s23, %s25
      %p29 = scmp.eq.s32.totalorder %s15, 0
      %p30 = por %p28, %p29
      %p31 = scmp.ne.s32.totalorder %s23, %s25
      %p32 = scmp.eq.s32.totalorder %s20, 2
      %p33 = por %p31, %p32
      %p34 = scmp.ne.s32.totalorder %s25, %s26
      %p35 = scmp.eq.s32.totalorder %s20, 0
      %p36 = por %p34, %p35
      %p37 = scmp.ne.s32.totalorder %s25, %s26
      %p38 = scmp.eq.s32.totalorder %s21, 2
      %p39 = por %p37, %p38
      %p41 = scmp.ne.s32.totalorder %s26, %s40
      %p42 = scmp.eq.s32.totalorder %s21, 0
      %p43 = por %p41, %p42
      %s44 = ssub.s32 %s15, %s22
      %p45 = scmp.eq.s32.totalorder %s44, 0
      %s47 = sadd.s32 %s46, 1
      %s48 = scalar_select %p45, %s46, %s47
      %p51 = pneg %p45
      %p52 = scmp.eq.s32.totalorder %s15, 2
      %p53 = por %p51, %p52
      %p54 = scmp.ne.s32.totalorder %s46, %s49
      %p55 = scmp.eq.s32.totalorder %s15, 0
      %p56 = por %p54, %p55
      %p57 = scmp.ne.s32.totalorder %s46, %s49
      %p58 = scmp.eq.s32.totalorder %s20, 2
      %p59 = por %p57, %p58
      %p60 = scmp.ne.s32.totalorder %s49, %s50
      %p61 = scmp.eq.s32.totalorder %s20, 0
      %p62 = por %p60, %p61
      %p63 = scmp.ne.s32.totalorder %s49, %s50
      %p64 = scmp.eq.s32.totalorder %s21, 2
      %p65 = por %p63, %p64
      %p67 = scmp.ne.s32.totalorder %s50, %s66
      %p68 = scmp.eq.s32.totalorder %s21, 0
      %p69 = por %p67, %p68
      %s70 = ssub.s32 %s15, %s22
      %p71 = scmp.eq.s32.totalorder %s70, 0
      %s73 = sadd.s32 %s72, 1
      %s74 = scalar_select %p71, %s72, %s73
      %p77 = pneg %p71
      %p78 = scmp.eq.s32.totalorder %s15, 2
      %p79 = por %p77, %p78
      %p80 = scmp.ne.s32.totalorder %s72, %s75
      %p81 = scmp.eq.s32.totalorder %s15, 0
      %p82 = por %p80, %p81
      %p83 = scmp.ne.s32.totalorder %s72, %s75
      %p84 = scmp.eq.s32.totalorder %s20, 2
      %p85 = por %p83, %p84
      %p86 = scmp.ne.s32.totalorder %s75, %s76
      %p87 = scmp.eq.s32.totalorder %s20, 0
      %p88 = por %p86, %p87
      %p89 = scmp.ne.s32.totalorder %s75, %s76
      %p90 = scmp.eq.s32.totalorder %s21, 2
      %p91 = por %p89, %p90
      %p93 = scmp.ne.s32.totalorder %s76, %s92
      %p94 = scmp.eq.s32.totalorder %s21, 0
      %p95 = por %p93, %p94
      %p96 = scmp.le.s32.totalorder 1, %s15
      %p97 = scmp.lt.s32.totalorder %s15, 4
      %p98 = pnand %p96, %p97
      %p99 = pneg %p98
      // Predicated region
      $region9: #{tpu_custom_call.1} parent=5 // pred_check
        _
      $region10: #{tpu_custom_call.1} parent=5 // pred_check_branch
        %101 = sbr.rel (%p98) target = $region12
      $region11: #{tpu_custom_call.1} parent=5 // pred_region
        %s102 = ssub.s32 %s15, 1
        // Predicated region
        $region13: #{tpu_custom_call.1} parent=11 // pred_check
          %p103 = pneg %p36
        $region14: #{tpu_custom_call.1} parent=11 // pred_check_branch
          %105 = sbr.rel (%p103) target = $region16
        $region15: #{tpu_custom_call.1} parent=11 // pred_region
          %s107 = ssub.s32 128, 128
          %108 = vsyncadd [#allocation3], %s107
          %s110 = sshll.u32 [#allocation2], 4
          %s111 = int_to_ptr.vmem [resolvable:$true] %s110
          %113 = dma.hbm_to_vmem [thread:$0]  %s0, 128, %s111, [#allocation3]
        $region16: #{tpu_custom_call.1} parent=11 // pred_fallthru
          _
      $region12: #{tpu_custom_call.1} parent=5 // pred_fallthru
        _
      %p114 = scmp.lt.s32.totalorder %s15, 3
      // Predicated region
      $region17: #{tpu_custom_call.1} parent=5 // pred_check
        %p115 = pneg %p114
      $region18: #{tpu_custom_call.1} parent=5 // pred_check_branch
        %117 = sbr.rel (%p115) target = $region20
      $region19: #{tpu_custom_call.1} parent=5 // pred_region
        // Predicated region
        $region21: #{tpu_custom_call.1} parent=19 // pred_check
          %p118 = pneg %p56
        $region22: #{tpu_custom_call.1} parent=19 // pred_check_branch
          %120 = sbr.rel (%p118) target = $region24
        $region23: #{tpu_custom_call.1} parent=19 // pred_region
          %s121 = sand.u32 %s46, 1
          %s122 = scalar_lea.sflag [#allocation6], %s121
          %s123 = sand.u32 %s46, 1
          %s124 = smul.addr %s123, 8
          %s125 = scalar_lea.vmem [#allocation5], %s124
          %s127 = ssub.s32 128, 128
          %128 = vsyncadd %s122, %s127
          %s129 = smul.addr %s15, 128
          %s130 = scalar_lea.hbm %s1, %s129
          %s132 = sshll.u32 %s125, 4
          %s133 = int_to_ptr.vmem [resolvable:$true] %s132
          %135 = dma.hbm_to_vmem [thread:$0]  %s130, 128, %s133, %s122
        $region24: #{tpu_custom_call.1} parent=19 // pred_fallthru
          _
      $region20: #{tpu_custom_call.1} parent=5 // pred_fallthru
        _
      %p136 = scmp.le.s32.totalorder 1, %s15
      %p137 = scmp.lt.s32.totalorder %s15, 4
      %p138 = pnand %p136, %p137
      %p139 = pneg %p138
      // Predicated region
      $region25: #{tpu_custom_call.1} parent=5 // pred_check
        _
      $region26: #{tpu_custom_call.1} parent=5 // pred_check_branch
        %141 = sbr.rel (%p138) target = $region28
      $region27: #{tpu_custom_call.1} parent=5 // pred_region
        %s142 = ssub.s32 %s15, 1
        // Predicated region
        $region29: #{tpu_custom_call.1} parent=27 // pred_check
          %p143 = pneg %p36
        $region30: #{tpu_custom_call.1} parent=27 // pred_check_branch
          %145 = sbr.rel (%p143) target = $region32
        $region31: #{tpu_custom_call.1} parent=27 // pred_region
          %146 = dma.done [#allocation3], 128
        $region32: #{tpu_custom_call.1} parent=27 // pred_fallthru
          _
        %s147 = sand.u32 %s49, 1
        %s148 = scalar_lea.sflag [#allocation6], %s147
        %s149 = sand.u32 %s49, 1
        %s150 = smul.addr %s149, 8
        %s151 = scalar_lea.vmem [#allocation5], %s150
        // Predicated region
        $region33: #{tpu_custom_call.1} parent=27 // pred_check
          %p152 = pneg %p62
        $region34: #{tpu_custom_call.1} parent=27 // pred_check_branch
          %154 = sbr.rel (%p152) target = $region36
        $region35: #{tpu_custom_call.1} parent=27 // pred_region
          %155 = dma.done %s148, 128
        $region36: #{tpu_custom_call.1} parent=27 // pred_fallthru
          _
        %p156 = pneg %p36
        %p157 = pneg %p33
        %s158 = sand.u32 %s49, 1
        %s159 = scalar_lea.sflag [#allocation6], %s158
        %s160 = sand.u32 %s49, 1
        %s161 = smul.addr %s160, 8
        %s162 = scalar_lea.vmem [#allocation5], %s161
        %p163 = pneg %p62
        %p164 = pneg %p59
        %p165 = pneg %p88
        %p166 = pneg %p85
        %s167 = sand.u32 %s75, 1
        %s168 = scalar_lea.sflag [#allocation4], %s167
        %s169 = sand.u32 %s75, 1
        %s170 = smul.addr %s169, 8
        %s171 = scalar_lea.vmem [#allocation7], %s170
        %v172 = vld [vmem:[%s151] sm:$0xff]
        %v173 = vld [vmem:[#allocation2] sm:$0xff]
        %vm174 = vcmask 64512
        %v176 = vsel %vm174, %v173, 0
        %178 = vmatprep.subr.mxu0 0.0
        %179 = vmatpush1.msra.mxu0 %v172
        %180 = vmatprep.subr.mxu0 0.0
        %181 = vmatpush1.msra.mxu0 0.0
        %182 = vmatprep.subr.mxu0 0.0
        %183 = vmatpush1.msra.mxu0 0.0
        %184 = vmatprep.subr.mxu0 0.0
        %185 = vmatpush1.msra.mxu0 0.0
        %186 = vmatprep.subr.mxu0 0.0
        %187 = vmatpush1.msra.mxu0 0.0
        %188 = vmatprep.subr.mxu0 0.0
        %189 = vmatpush1.msra.mxu0 0.0
        %190 = vmatprep.subr.mxu0 0.0
        %191 = vmatpush1.msra.mxu0 0.0
        %192 = vmatprep.subr.mxu0 0.0
        %193 = vmatpush1.msra.mxu0 0.0
        %194 = vmatprep.subr.mxu0 0.0
        %195 = vmatpush1.msra.mxu0 0.0
        %196 = vmatprep.subr.mxu0 0.0
        %197 = vmatpush1.msra.mxu0 0.0
        %198 = vmatprep.subr.mxu0 0.0
        %199 = vmatpush1.msra.mxu0 0.0
        %200 = vmatprep.subr.mxu0 0.0
        %201 = vmatpush1.msra.mxu0 0.0
        %202 = vmatprep.subr.mxu0 0.0
        %203 = vmatpush1.msra.mxu0 0.0
        %204 = vmatprep.subr.mxu0 0.0
        %205 = vmatpush1.msra.mxu0 0.0
        %206 = vmatprep.subr.mxu0 0.0
        %207 = vmatpush1.msra.mxu0 0.0
        %208 = vmatprep.subr.mxu0 0.0
        %209 = vmatpush1.msra.mxu0 0.0
        %210 = vmatprep.subr.mxu0 0.0
        %211 = vmatpush1.msra.mxu0 0.0
        %212 = vmatprep.subr.mxu0 0.0
        %213 = vmatpush1.msra.mxu0 0.0
        %214 = vmatprep.subr.mxu0 0.0
        %215 = vmatpush1.msra.mxu0 0.0
        %216 = vmatprep.subr.mxu0 0.0
        %217 = vmatpush1.msra.mxu0 0.0
        %218 = vmatprep.subr.mxu0 0.0
        %219 = vmatpush1.msra.mxu0 0.0
        %220 = vmatprep.subr.mxu0 0.0
        %221 = vmatpush1.msra.mxu0 0.0
        %222 = vmatprep.subr.mxu0 0.0
        %223 = vmatpush1.msra.mxu0 0.0
        %224 = vmatprep.subr.mxu0 0.0
        %225 = vmatpush1.msra.mxu0 0.0
        %226 = vmatprep.subr.mxu0 0.0
        %227 = vmatpush1.msra.mxu0 0.0
        %228 = vmatprep.subr.mxu0 0.0
        %229 = vmatpush1.msra.mxu0 0.0
        %230 = vmatprep.subr.mxu0 0.0
        %231 = vmatpush1.msra.mxu0 0.0
        %232 = vmatprep.subr.mxu0 0.0
        %233 = vmatpush1.msra.mxu0 0.0
        %234 = vmatprep.subr.mxu0 0.0
        %235 = vmatpush1.msra.mxu0 0.0
        %236 = vmatprep.subr.mxu0 0.0
        %237 = vmatpush1.msra.mxu0 0.0
        %238 = vmatprep.subr.mxu0 0.0
        %239 = vmatpush1.msra.mxu0 0.0
        %240 = vmatprep.subr.mxu0 0.0
        %241 = vmatpush1.msra.mxu0 0.0
        %242 = vmatprep.mubr.f32.mxu0 0.0
        %243 = vmatmul.mubr.f32.gmra.mrb[0].mxu0 %v176
        %v244 = vpop.f32.mrb[0].mxu0
        %v245 = vadd.f32 0.0, %v244
        %v246 = vpop.f32.mrb[0].mxu0
        %247 = vdwg.mxu0
        %v248 = vlaneseq
        %v249 = vand.u32 %v248, 127
        %vm250 = vcmp.lt.s32.totalorder %v249, 0
        %v251 = vsub.s32 0, %v249
        %v252 = vsel %vm250, %v251, %v249
        %v253 = vshrl.u32 %v252, 3
        %v254 = vand.u32 %v252, 7
        %v255 = vsub.s32 0, %v254
        %v256 = vsel %vm250, %v255, %v254
        %vm257 = vcmp.ne.s32.totalorder %v256, 0
        %vm258 = vcmp.lt.s32.totalorder %v256, 0
        %vm259 = vmand %vm258, %vm257
        %v260 = vadd.s32 %v256, 8
        %v261 = vsel %vm259, %v260, %v256
        %262 = vrot.lane.b32.xlu0 %v245, 1
        %v263 = vpop.permute.xlu0 %262
        %264 = vrot.lane.b32.xlu0 %v245, 127
        %v265 = vpop.permute.xlu0 %264
        %vm266 = vcmp.gt.s32.totalorder %v261, 0
        %v267 = vsel %vm266, %v263, 0.0
        %v268 = vadd.f32 %v245, %v267
        %vm269 = vcmp.lt.s32.totalorder %v261, 7
        %v270 = vsel %vm269, %v265, 0.0
        %v271 = vadd.f32 %v268, %v270
        %v272 = vmul.f32 %v271, 0.11111111
        %273 = vst [vmem:[%s171] sm:$0xff] %v272
        %s274 = sand.u32 %s75, 1
        %s275 = scalar_lea.sflag [#allocation4], %s274
        %s276 = sand.u32 %s75, 1
        %s277 = smul.addr %s276, 8
        %s278 = scalar_lea.vmem [#allocation7], %s277
        // Predicated region
        $region37: #{tpu_custom_call.1} parent=27 // pred_check
          %p279 = pneg %p85
        $region38: #{tpu_custom_call.1} parent=27 // pred_check_branch
          %281 = sbr.rel (%p279) target = $region40
        $region39: #{tpu_custom_call.1} parent=27 // pred_region
          %s283 = ssub.s32 128, 128
          %284 = vsyncadd %s275, %s283
          %s285 = smul.addr %s20, 128
          %s286 = scalar_lea.hbm %s2, %s285
          %s288 = sshll.u32 %s278, 4
          %s289 = int_to_ptr.vmem [resolvable:$true] %s288
          %291 = dma.vmem_to_hbm [thread:$0]  %s289, 128, %s286, %s275
        $region40: #{tpu_custom_call.1} parent=27 // pred_fallthru
          _
      $region28: #{tpu_custom_call.1} parent=5 // pred_fallthru
        _
      %p292 = scmp.le.s32.totalorder 2, %s15
      // Predicated region
      $region41: #{tpu_custom_call.1} parent=5 // pred_check
        %p293 = pneg %p292
      $region42: #{tpu_custom_call.1} parent=5 // pred_check_branch
        %295 = sbr.rel (%p293) target = $region44
      $region43: #{tpu_custom_call.1} parent=5 // pred_region
        %s296 = ssub.s32 %s15, 2
        // Predicated region
        $region45: #{tpu_custom_call.1} parent=43 // pred_check
          %p297 = pneg %p91
        $region46: #{tpu_custom_call.1} parent=43 // pred_check_branch
          %299 = sbr.rel (%p297) target = $region48
        $region47: #{tpu_custom_call.1} parent=43 // pred_region
          %s300 = sand.u32 %s76, 1
          %s301 = scalar_lea.sflag [#allocation4], %s300
          %s302 = sand.u32 %s76, 1
          %s303 = smul.addr %s302, 8
          %s304 = scalar_lea.vmem [#allocation7], %s303
          %305 = dma.done %s301, 128
        $region48: #{tpu_custom_call.1} parent=43 // pred_fallthru
          _
      $region44: #{tpu_custom_call.1} parent=5 // pred_fallthru
        _
    $region6: #{tpu_custom_call.1} parent=1 // loop_footer
      %s19 = sadd.s32 1, %s15
    $region7: #{tpu_custom_call.1} parent=1 // loop_footer_branch
      %14 = sbr.rel target = $region3
    $region8: #{tpu_custom_call.1} parent=1 // loop_exit
      _
    %306 = vsyncpa [#allocation3], 1
    %s307 = scalar_lea.sflag [#allocation3], 1
    %308 = vsyncpa %s307, 1
    %309 = vsyncpa [#allocation6], 1
    %s310 = scalar_lea.sflag [#allocation6], 1
    %311 = vsyncpa %s310, 1
    %312 = vsyncpa [#allocation4], 1
    %s313 = scalar_lea.sflag [#allocation4], 1
    %314 = vsyncpa %s313, 1

</llo_original>
